<compile_context>
chip_gen: v6e
topology: v6e:2x2x1
jax: 0.10.0
libtpu: 0.0.40
codegen_flags: <defaults>
</compile_context>

<pallas_src>
import functools

import jax
import jax.numpy as jnp
from jax.experimental import pallas as pl
from jax.experimental.pallas import tpu as pltpu


def _fused_lstm_mlp_kernel(x_ref, wih_ref, whh_ref, b_ref,
                           w1_ref, b1_ref, w2_ref, b2_ref,
                           out_ref, *, seq_len, batch_pad, hidden_size):
    """Single invocation: full LSTM recurrence + MLP head.

    x_ref   : (T*Bp, I)   time-major, batch-padded, flattened input
    out_ref : (1, T*Bp)   per-timestep scalar outputs, lane-dense (column = t*Bp + b)
    """
    T, Bp, H = seq_len, batch_pad, hidden_size

    # --- 1) Input projection hoisted off the serial path: one batched matmul. ---
    # (T*Bp, I) @ (I, 4H) + (b_ih + b_hh)  ->  (T*Bp, 4H)
    xw = jnp.dot(x_ref[...], wih_ref[...],
                 preferred_element_type=jnp.float32) + b_ref[...]

    whh = whh_ref[...]                                   # (H, 4H), stays in vregs

    # --- 2) Serial recurrence, fully unrolled (T is static and small). ---
    h = jnp.zeros((Bp, H), jnp.float32)
    c = jnp.zeros((Bp, H), jnp.float32)
    hs = []
    for t in range(T):                                   # static unroll -> LLO can overlap steps
        gates = xw[t * Bp:(t + 1) * Bp, :] + jnp.dot(
            h, whh, preferred_element_type=jnp.float32)  # (Bp, 4H) = one (8,128) vreg
        # Two full-vreg EUP passes, then 32-lane slices (gate order i, f, g, o).
        sig = jax.nn.sigmoid(gates)
        tnh = jnp.tanh(gates)
        i_g = sig[:, 0 * H:1 * H]
        f_g = sig[:, 1 * H:2 * H]
        g_g = tnh[:, 2 * H:3 * H]
        o_g = sig[:, 3 * H:4 * H]
        c = f_g * c + i_g * g_g
        h = o_g * jnp.tanh(c)
        hs.append(h)

    # --- 3) Batched MLP head over all timesteps, computed transposed for a lane-dense
    #        output store.  One XLU transpose, off the serial path. ---
    hs_all = jnp.concatenate(hs, axis=0)                 # (T*Bp, H)
    hs_t = hs_all.T                                      # (H, T*Bp)
    y = jnp.dot(w1_ref[...], hs_t,
                preferred_element_type=jnp.float32) + b1_ref[...]   # (H, T*Bp)
    y = jnp.maximum(y, 0.01 * y)                         # LeakyReLU(0.01), single VPU op
    y = jnp.dot(w2_ref[...], y,
                preferred_element_type=jnp.float32) + b2_ref[...]   # (1, T*Bp)
    out_ref[...] = y                                     # single unmasked lane-dense store


def prepare_params(params):
    """One-time parameter glue (transposes / bias fusion) done at init, not per call."""
    H = params["w_hh"].shape[1]
    return {
        "wih_t": params["w_ih"].T,                                      # (I, 4H)
        "whh_t": params["w_hh"].T,                                      # (H, 4H)
        "bias": (params["b_ih"] + params["b_hh"]).reshape(1, 4 * H),    # (1, 4H)
        "w1": params["w1"],                                             # (H, H)   used as W1 @ hs^T
        "b1_col": params["b1"].reshape(H, 1),                           # (H, 1)
        "w2": params["w2"],                                             # (1, H)
        "b2": params["b2"].reshape(1, 1),                               # (1, 1)
    }


@jax.jit
def lstm_model_forward(x, prep):
    """x: (B, T, input_size) f32, prep: prepare_params(...)  ->  (B, T, 1) f32."""
    B, T, I = x.shape
    H = prep["w1"].shape[0]
    Bp = ((B + 7) // 8) * 8                              # pad batch to a sublane multiple (f32: 8)

    # Time-major, batch padded with zero rows (row-independent LSTM -> padding is inert),
    # flattened to (T*Bp, I) so the kernel does one batched input projection.
    x_tm = jnp.transpose(x, (1, 0, 2))                   # (T, B, I)
    x_tm = jnp.pad(x_tm, ((0, 0), (0, Bp - B), (0, 0)))  # (T, Bp, I)
    x_flat = x_tm.reshape(T * Bp, I)

    vmem = pltpu.MemorySpace.VMEM
    cost = pl.CostEstimate(
        flops=(2 * T * Bp * I * 4 * H          # input projection
               + T * 2 * Bp * H * 4 * H        # recurrent matmuls
               + 2 * T * Bp * H * H            # linear_1
               + 2 * T * Bp * H),              # linear_2
        transcendentals=T * Bp * 9 * H,        # sigmoid + tanh on (Bp,4H) + tanh(c)
        bytes_accessed=4 * (T * Bp * I + I * 4 * H + H * 4 * H + 4 * H
                            + H * H + H + H + 1 + T * Bp),
    )

    out_flat = pl.pallas_call(
        functools.partial(_fused_lstm_mlp_kernel,
                          seq_len=T, batch_pad=Bp, hidden_size=H),
        out_shape=jax.ShapeDtypeStruct((1, T * Bp), jnp.float32),
        in_specs=[pl.BlockSpec(memory_space=vmem) for _ in range(8)],
        out_specs=pl.BlockSpec(memory_space=vmem),
        cost_estimate=cost,
    )(x_flat, prep["wih_t"], prep["whh_t"], prep["bias"],
      prep["w1"], prep["b1_col"], prep["w2"], prep["b2"])

    out = out_flat.reshape(T, Bp)[:, :B]                 # (T, B)  drop padded batch rows
    return jnp.transpose(out, (1, 0))[..., None]         # (B, T, 1)


def init_params(key, input_size=13, hidden_size=32):
    """Deterministic init mimicking PyTorch's U(-1/sqrt(H), 1/sqrt(H))."""
    ks = jax.random.split(key, 8)
    H, I = hidden_size, input_size
    bound = 1.0 / jnp.sqrt(jnp.float32(H))
    u = lambda k, shape: jax.random.uniform(k, shape, jnp.float32, -bound, bound)
    return {
        "w_ih": u(ks[0], (4 * H, I)),
        "w_hh": u(ks[1], (4 * H, H)),
        "b_ih": u(ks[2], (4 * H,)),
        "b_hh": u(ks[3], (4 * H,)),
        "w1": u(ks[4], (H, H)),
        "b1": u(ks[5], (H,)),
        "w2": u(ks[6], (1, H)),
        "b2": u(ks[7], (1,)),
    }


def reference_forward(x, params):
    """Pure-JAX reference matching torch semantics (for correctness check)."""
    H = params["w_hh"].shape[1]
    B = x.shape[0]

    def step(carry, x_t):
        h, c = carry
        gates = (x_t @ params["w_ih"].T + params["b_ih"]
                 + h @ params["w_hh"].T + params["b_hh"])
        i = jax.nn.sigmoid(gates[:, 0 * H:1 * H])
        f = jax.nn.sigmoid(gates[:, 1 * H:2 * H])
        g = jnp.tanh(gates[:, 2 * H:3 * H])
        o = jax.nn.sigmoid(gates[:, 3 * H:4 * H])
        c = f * c + i * g
        h = o * jnp.tanh(c)
        return (h, c), h

    h0 = jnp.zeros((B, H), jnp.float32)
    c0 = jnp.zeros((B, H), jnp.float32)
    _, hs = jax.lax.scan(step, (h0, c0), jnp.transpose(x, (1, 0, 2)))
    hs = jnp.transpose(hs, (1, 0, 2))                    # (B, T, H)
    y = hs @ params["w1"].T + params["b1"]
    y = jnp.where(y >= 0, y, 0.01 * y)
    y = y @ params["w2"].T + params["b2"]
    return y


if __name__ == "__main__":
    key = jax.random.PRNGKey(0)
    k_param, k_x = jax.random.split(key)

    B, T, I, H = 2, 8, 13, 32
    params = init_params(k_param, input_size=I, hidden_size=H)
    prep = prepare_params(params)
    x = jax.random.normal(k_x, (B, T, I), jnp.float32)

    out = jax.block_until_ready(lstm_model_forward(x, prep))
    ref = jax.block_until_ready(reference_forward(x, params))

    assert out.shape == (B, T, 1), out.shape
    err = float(jnp.max(jnp.abs(out - ref)))
    assert jnp.allclose(out, ref, atol=1e-5, rtol=1e-5), err
    print("KERNEL_OK")
</pallas_src>

<mosaic_0001>
module attributes {stable_mosaic.version = 11 : i64} {
  func.func @_fused_lstm_mlp_kernel(%arg0: memref<64x13xf32, #tpu.memory_space<vmem>>, %arg1: memref<13x128xf32, #tpu.memory_space<vmem>>, %arg2: memref<32x128xf32, #tpu.memory_space<vmem>>, %arg3: memref<1x128xf32, #tpu.memory_space<vmem>>, %arg4: memref<32x32xf32, #tpu.memory_space<vmem>>, %arg5: memref<32x1xf32, #tpu.memory_space<vmem>>, %arg6: memref<1x32xf32, #tpu.memory_space<vmem>>, %arg7: memref<1x1xf32, #tpu.memory_space<vmem>>, %arg8: memref<1x64xf32, #tpu.memory_space<vmem>>) attributes {dimension_semantics = [], scalar_prefetch = 0 : i64, scratch_operands = 0 : i64, tpu.core_type = #tpu.core_type<tc>} {
    %c0 = arith.constant 0 : index
    %c0_0 = arith.constant 0 : index
    %0 = vector.load %arg0[%c0, %c0_0] : memref<64x13xf32, #tpu.memory_space<vmem>>, vector<64x13xf32>
    %c0_1 = arith.constant 0 : index
    %c0_2 = arith.constant 0 : index
    %1 = vector.load %arg1[%c0_1, %c0_2] : memref<13x128xf32, #tpu.memory_space<vmem>>, vector<13x128xf32>
    %cst = arith.constant dense<0.000000e+00> : vector<64x128xf32>
    %2 = tpu.matmul %0, %1, %cst {dimension_numbers = #tpu.dot_dimension_numbers<[1], [0], [0], [1], [0, 0, 1, 1], [], []>} : vector<64x13xf32>, vector<13x128xf32>, vector<64x128xf32> -> vector<64x128xf32>
    %c0_3 = arith.constant 0 : index
    %c0_4 = arith.constant 0 : index
    %3 = vector.load %arg3[%c0_3, %c0_4] : memref<1x128xf32, #tpu.memory_space<vmem>>, vector<1x128xf32>
    %4 = vector.broadcast %3 : vector<1x128xf32> to vector<64x128xf32>
    %5 = arith.addf %2, %4 : vector<64x128xf32>
    %c0_5 = arith.constant 0 : index
    %c0_6 = arith.constant 0 : index
    %6 = vector.load %arg2[%c0_5, %c0_6] : memref<32x128xf32, #tpu.memory_space<vmem>>, vector<32x128xf32>
    %cst_7 = arith.constant 0.000000e+00 : f32
    %7 = vector.broadcast %cst_7 : f32 to vector<8x32xf32>
    %cst_8 = arith.constant 0.000000e+00 : f32
    %8 = vector.broadcast %cst_8 : f32 to vector<8x32xf32>
    %9 = vector.extract_strided_slice %5 {offsets = [0, 0], sizes = [8, 128], strides = [1, 1]} : vector<64x128xf32> to vector<8x128xf32>
    %cst_9 = arith.constant dense<0.000000e+00> : vector<8x128xf32>
    %10 = tpu.matmul %7, %6, %cst_9 {dimension_numbers = #tpu.dot_dimension_numbers<[1], [0], [0], [1], [0, 0, 1, 1], [], []>} : vector<8x32xf32>, vector<32x128xf32>, vector<8x128xf32> -> vector<8x128xf32>
    %11 = arith.addf %9, %10 : vector<8x128xf32>
    %12 = arith.negf %11 : vector<8x128xf32>
    %13 = math.exp %12 : vector<8x128xf32>
    %cst_10 = arith.constant 1.000000e+00 : f32
    %14 = vector.broadcast %cst_10 : f32 to vector<8x128xf32>
    %15 = arith.addf %14, %13 : vector<8x128xf32>
    %16 = arith.divf %14, %15 : vector<8x128xf32>
    %17 = math.tanh %11 : vector<8x128xf32>
    %18 = vector.extract_strided_slice %16 {offsets = [0, 0], sizes = [8, 32], strides = [1, 1]} : vector<8x128xf32> to vector<8x32xf32>
    %19 = vector.extract_strided_slice %16 {offsets = [0, 32], sizes = [8, 32], strides = [1, 1]} : vector<8x128xf32> to vector<8x32xf32>
    %20 = vector.extract_strided_slice %17 {offsets = [0, 64], sizes = [8, 32], strides = [1, 1]} : vector<8x128xf32> to vector<8x32xf32>
    %21 = vector.extract_strided_slice %16 {offsets = [0, 96], sizes = [8, 32], strides = [1, 1]} : vector<8x128xf32> to vector<8x32xf32>
    %22 = arith.mulf %19, %8 : vector<8x32xf32>
    %23 = arith.mulf %18, %20 : vector<8x32xf32>
    %24 = arith.addf %22, %23 : vector<8x32xf32>
    %25 = math.tanh %24 : vector<8x32xf32>
    %26 = arith.mulf %21, %25 : vector<8x32xf32>
    %27 = vector.extract_strided_slice %5 {offsets = [8, 0], sizes = [8, 128], strides = [1, 1]} : vector<64x128xf32> to vector<8x128xf32>
    %cst_11 = arith.constant dense<0.000000e+00> : vector<8x128xf32>
    %28 = tpu.matmul %26, %6, %cst_11 {dimension_numbers = #tpu.dot_dimension_numbers<[1], [0], [0], [1], [0, 0, 1, 1], [], []>} : vector<8x32xf32>, vector<32x128xf32>, vector<8x128xf32> -> vector<8x128xf32>
    %29 = arith.addf %27, %28 : vector<8x128xf32>
    %30 = arith.negf %29 : vector<8x128xf32>
    %31 = math.exp %30 : vector<8x128xf32>
    %cst_12 = arith.constant 1.000000e+00 : f32
    %32 = vector.broadcast %cst_12 : f32 to vector<8x128xf32>
    %33 = arith.addf %32, %31 : vector<8x128xf32>
    %34 = arith.divf %32, %33 : vector<8x128xf32>
    %35 = math.tanh %29 : vector<8x128xf32>
    %36 = vector.extract_strided_slice %34 {offsets = [0, 0], sizes = [8, 32], strides = [1, 1]} : vector<8x128xf32> to vector<8x32xf32>
    %37 = vector.extract_strided_slice %34 {offsets = [0, 32], sizes = [8, 32], strides = [1, 1]} : vector<8x128xf32> to vector<8x32xf32>
    %38 = vector.extract_strided_slice %35 {offsets = [0, 64], sizes = [8, 32], strides = [1, 1]} : vector<8x128xf32> to vector<8x32xf32>
    %39 = vector.extract_strided_slice %34 {offsets = [0, 96], sizes = [8, 32], strides = [1, 1]} : vector<8x128xf32> to vector<8x32xf32>
    %40 = arith.mulf %37, %24 : vector<8x32xf32>
    %41 = arith.mulf %36, %38 : vector<8x32xf32>
    %42 = arith.addf %40, %41 : vector<8x32xf32>
    %43 = math.tanh %42 : vector<8x32xf32>
    %44 = arith.mulf %39, %43 : vector<8x32xf32>
    %45 = vector.extract_strided_slice %5 {offsets = [16, 0], sizes = [8, 128], strides = [1, 1]} : vector<64x128xf32> to vector<8x128xf32>
    %cst_13 = arith.constant dense<0.000000e+00> : vector<8x128xf32>
    %46 = tpu.matmul %44, %6, %cst_13 {dimension_numbers = #tpu.dot_dimension_numbers<[1], [0], [0], [1], [0, 0, 1, 1], [], []>} : vector<8x32xf32>, vector<32x128xf32>, vector<8x128xf32> -> vector<8x128xf32>
    %47 = arith.addf %45, %46 : vector<8x128xf32>
    %48 = arith.negf %47 : vector<8x128xf32>
    %49 = math.exp %48 : vector<8x128xf32>
    %cst_14 = arith.constant 1.000000e+00 : f32
    %50 = vector.broadcast %cst_14 : f32 to vector<8x128xf32>
    %51 = arith.addf %50, %49 : vector<8x128xf32>
    %52 = arith.divf %50, %51 : vector<8x128xf32>
    %53 = math.tanh %47 : vector<8x128xf32>
    %54 = vector.extract_strided_slice %52 {offsets = [0, 0], sizes = [8, 32], strides = [1, 1]} : vector<8x128xf32> to vector<8x32xf32>
    %55 = vector.extract_strided_slice %52 {offsets = [0, 32], sizes = [8, 32], strides = [1, 1]} : vector<8x128xf32> to vector<8x32xf32>
    %56 = vector.extract_strided_slice %53 {offsets = [0, 64], sizes = [8, 32], strides = [1, 1]} : vector<8x128xf32> to vector<8x32xf32>
    %57 = vector.extract_strided_slice %52 {offsets = [0, 96], sizes = [8, 32], strides = [1, 1]} : vector<8x128xf32> to vector<8x32xf32>
    %58 = arith.mulf %55, %42 : vector<8x32xf32>
    %59 = arith.mulf %54, %56 : vector<8x32xf32>
    %60 = arith.addf %58, %59 : vector<8x32xf32>
    %61 = math.tanh %60 : vector<8x32xf32>
    %62 = arith.mulf %57, %61 : vector<8x32xf32>
    %63 = vector.extract_strided_slice %5 {offsets = [24, 0], sizes = [8, 128], strides = [1, 1]} : vector<64x128xf32> to vector<8x128xf32>
    %cst_15 = arith.constant dense<0.000000e+00> : vector<8x128xf32>
    %64 = tpu.matmul %62, %6, %cst_15 {dimension_numbers = #tpu.dot_dimension_numbers<[1], [0], [0], [1], [0, 0, 1, 1], [], []>} : vector<8x32xf32>, vector<32x128xf32>, vector<8x128xf32> -> vector<8x128xf32>
    %65 = arith.addf %63, %64 : vector<8x128xf32>
    %66 = arith.negf %65 : vector<8x128xf32>
    %67 = math.exp %66 : vector<8x128xf32>
    %cst_16 = arith.constant 1.000000e+00 : f32
    %68 = vector.broadcast %cst_16 : f32 to vector<8x128xf32>
    %69 = arith.addf %68, %67 : vector<8x128xf32>
    %70 = arith.divf %68, %69 : vector<8x128xf32>
    %71 = math.tanh %65 : vector<8x128xf32>
    %72 = vector.extract_strided_slice %70 {offsets = [0, 0], sizes = [8, 32], strides = [1, 1]} : vector<8x128xf32> to vector<8x32xf32>
    %73 = vector.extract_strided_slice %70 {offsets = [0, 32], sizes = [8, 32], strides = [1, 1]} : vector<8x128xf32> to vector<8x32xf32>
    %74 = vector.extract_strided_slice %71 {offsets = [0, 64], sizes = [8, 32], strides = [1, 1]} : vector<8x128xf32> to vector<8x32xf32>
    %75 = vector.extract_strided_slice %70 {offsets = [0, 96], sizes = [8, 32], strides = [1, 1]} : vector<8x128xf32> to vector<8x32xf32>
    %76 = arith.mulf %73, %60 : vector<8x32xf32>
    %77 = arith.mulf %72, %74 : vector<8x32xf32>
    %78 = arith.addf %76, %77 : vector<8x32xf32>
    %79 = math.tanh %78 : vector<8x32xf32>
    %80 = arith.mulf %75, %79 : vector<8x32xf32>
    %81 = vector.extract_strided_slice %5 {offsets = [32, 0], sizes = [8, 128], strides = [1, 1]} : vector<64x128xf32> to vector<8x128xf32>
    %cst_17 = arith.constant dense<0.000000e+00> : vector<8x128xf32>
    %82 = tpu.matmul %80, %6, %cst_17 {dimension_numbers = #tpu.dot_dimension_numbers<[1], [0], [0], [1], [0, 0, 1, 1], [], []>} : vector<8x32xf32>, vector<32x128xf32>, vector<8x128xf32> -> vector<8x128xf32>
    %83 = arith.addf %81, %82 : vector<8x128xf32>
    %84 = arith.negf %83 : vector<8x128xf32>
    %85 = math.exp %84 : vector<8x128xf32>
    %cst_18 = arith.constant 1.000000e+00 : f32
    %86 = vector.broadcast %cst_18 : f32 to vector<8x128xf32>
    %87 = arith.addf %86, %85 : vector<8x128xf32>
    %88 = arith.divf %86, %87 : vector<8x128xf32>
    %89 = math.tanh %83 : vector<8x128xf32>
    %90 = vector.extract_strided_slice %88 {offsets = [0, 0], sizes = [8, 32], strides = [1, 1]} : vector<8x128xf32> to vector<8x32xf32>
    %91 = vector.extract_strided_slice %88 {offsets = [0, 32], sizes = [8, 32], strides = [1, 1]} : vector<8x128xf32> to vector<8x32xf32>
    %92 = vector.extract_strided_slice %89 {offsets = [0, 64], sizes = [8, 32], strides = [1, 1]} : vector<8x128xf32> to vector<8x32xf32>
    %93 = vector.extract_strided_slice %88 {offsets = [0, 96], sizes = [8, 32], strides = [1, 1]} : vector<8x128xf32> to vector<8x32xf32>
    %94 = arith.mulf %91, %78 : vector<8x32xf32>
    %95 = arith.mulf %90, %92 : vector<8x32xf32>
    %96 = arith.addf %94, %95 : vector<8x32xf32>
    %97 = math.tanh %96 : vector<8x32xf32>
    %98 = arith.mulf %93, %97 : vector<8x32xf32>
    %99 = vector.extract_strided_slice %5 {offsets = [40, 0], sizes = [8, 128], strides = [1, 1]} : vector<64x128xf32> to vector<8x128xf32>
    %cst_19 = arith.constant dense<0.000000e+00> : vector<8x128xf32>
    %100 = tpu.matmul %98, %6, %cst_19 {dimension_numbers = #tpu.dot_dimension_numbers<[1], [0], [0], [1], [0, 0, 1, 1], [], []>} : vector<8x32xf32>, vector<32x128xf32>, vector<8x128xf32> -> vector<8x128xf32>
    %101 = arith.addf %99, %100 : vector<8x128xf32>
    %102 = arith.negf %101 : vector<8x128xf32>
    %103 = math.exp %102 : vector<8x128xf32>
    %cst_20 = arith.constant 1.000000e+00 : f32
    %104 = vector.broadcast %cst_20 : f32 to vector<8x128xf32>
    %105 = arith.addf %104, %103 : vector<8x128xf32>
    %106 = arith.divf %104, %105 : vector<8x128xf32>
    %107 = math.tanh %101 : vector<8x128xf32>
    %108 = vector.extract_strided_slice %106 {offsets = [0, 0], sizes = [8, 32], strides = [1, 1]} : vector<8x128xf32> to vector<8x32xf32>
    %109 = vector.extract_strided_slice %106 {offsets = [0, 32], sizes = [8, 32], strides = [1, 1]} : vector<8x128xf32> to vector<8x32xf32>
    %110 = vector.extract_strided_slice %107 {offsets = [0, 64], sizes = [8, 32], strides = [1, 1]} : vector<8x128xf32> to vector<8x32xf32>
    %111 = vector.extract_strided_slice %106 {offsets = [0, 96], sizes = [8, 32], strides = [1, 1]} : vector<8x128xf32> to vector<8x32xf32>
    %112 = arith.mulf %109, %96 : vector<8x32xf32>
    %113 = arith.mulf %108, %110 : vector<8x32xf32>
    %114 = arith.addf %112, %113 : vector<8x32xf32>
    %115 = math.tanh %114 : vector<8x32xf32>
    %116 = arith.mulf %111, %115 : vector<8x32xf32>
    %117 = vector.extract_strided_slice %5 {offsets = [48, 0], sizes = [8, 128], strides = [1, 1]} : vector<64x128xf32> to vector<8x128xf32>
    %cst_21 = arith.constant dense<0.000000e+00> : vector<8x128xf32>
    %118 = tpu.matmul %116, %6, %cst_21 {dimension_numbers = #tpu.dot_dimension_numbers<[1], [0], [0], [1], [0, 0, 1, 1], [], []>} : vector<8x32xf32>, vector<32x128xf32>, vector<8x128xf32> -> vector<8x128xf32>
    %119 = arith.addf %117, %118 : vector<8x128xf32>
    %120 = arith.negf %119 : vector<8x128xf32>
    %121 = math.exp %120 : vector<8x128xf32>
    %cst_22 = arith.constant 1.000000e+00 : f32
    %122 = vector.broadcast %cst_22 : f32 to vector<8x128xf32>
    %123 = arith.addf %122, %121 : vector<8x128xf32>
    %124 = arith.divf %122, %123 : vector<8x128xf32>
    %125 = math.tanh %119 : vector<8x128xf32>
    %126 = vector.extract_strided_slice %124 {offsets = [0, 0], sizes = [8, 32], strides = [1, 1]} : vector<8x128xf32> to vector<8x32xf32>
    %127 = vector.extract_strided_slice %124 {offsets = [0, 32], sizes = [8, 32], strides = [1, 1]} : vector<8x128xf32> to vector<8x32xf32>
    %128 = vector.extract_strided_slice %125 {offsets = [0, 64], sizes = [8, 32], strides = [1, 1]} : vector<8x128xf32> to vector<8x32xf32>
    %129 = vector.extract_strided_slice %124 {offsets = [0, 96], sizes = [8, 32], strides = [1, 1]} : vector<8x128xf32> to vector<8x32xf32>
    %130 = arith.mulf %127, %114 : vector<8x32xf32>
    %131 = arith.mulf %126, %128 : vector<8x32xf32>
    %132 = arith.addf %130, %131 : vector<8x32xf32>
    %133 = math.tanh %132 : vector<8x32xf32>
    %134 = arith.mulf %129, %133 : vector<8x32xf32>
    %135 = vector.extract_strided_slice %5 {offsets = [56, 0], sizes = [8, 128], strides = [1, 1]} : vector<64x128xf32> to vector<8x128xf32>
    %cst_23 = arith.constant dense<0.000000e+00> : vector<8x128xf32>
    %136 = tpu.matmul %134, %6, %cst_23 {dimension_numbers = #tpu.dot_dimension_numbers<[1], [0], [0], [1], [0, 0, 1, 1], [], []>} : vector<8x32xf32>, vector<32x128xf32>, vector<8x128xf32> -> vector<8x128xf32>
    %137 = arith.addf %135, %136 : vector<8x128xf32>
    %138 = arith.negf %137 : vector<8x128xf32>
    %139 = math.exp %138 : vector<8x128xf32>
    %cst_24 = arith.constant 1.000000e+00 : f32
    %140 = vector.broadcast %cst_24 : f32 to vector<8x128xf32>
    %141 = arith.addf %140, %139 : vector<8x128xf32>
    %142 = arith.divf %140, %141 : vector<8x128xf32>
    %143 = math.tanh %137 : vector<8x128xf32>
    %144 = vector.extract_strided_slice %142 {offsets = [0, 0], sizes = [8, 32], strides = [1, 1]} : vector<8x128xf32> to vector<8x32xf32>
    %145 = vector.extract_strided_slice %142 {offsets = [0, 32], sizes = [8, 32], strides = [1, 1]} : vector<8x128xf32> to vector<8x32xf32>
    %146 = vector.extract_strided_slice %143 {offsets = [0, 64], sizes = [8, 32], strides = [1, 1]} : vector<8x128xf32> to vector<8x32xf32>
    %147 = vector.extract_strided_slice %142 {offsets = [0, 96], sizes = [8, 32], strides = [1, 1]} : vector<8x128xf32> to vector<8x32xf32>
    %148 = arith.mulf %145, %132 : vector<8x32xf32>
    %149 = arith.mulf %144, %146 : vector<8x32xf32>
    %150 = arith.addf %148, %149 : vector<8x32xf32>
    %151 = math.tanh %150 : vector<8x32xf32>
    %152 = arith.mulf %147, %151 : vector<8x32xf32>
    %153 = tpu.concatenate %26, %44, %62, %80, %98, %116, %134, %152 in 0 : vector<8x32xf32>, vector<8x32xf32>, vector<8x32xf32>, vector<8x32xf32>, vector<8x32xf32>, vector<8x32xf32>, vector<8x32xf32>, vector<8x32xf32> -> vector<64x32xf32>
    %154 = tpu.transpose %153, [1, 0] : vector<64x32xf32> -> vector<32x64xf32>
    %c0_25 = arith.constant 0 : index
    %c0_26 = arith.constant 0 : index
    %155 = vector.load %arg4[%c0_25, %c0_26] : memref<32x32xf32, #tpu.memory_space<vmem>>, vector<32x32xf32>
    %cst_27 = arith.constant dense<0.000000e+00> : vector<32x64xf32>
    %156 = tpu.matmul %155, %154, %cst_27 {dimension_numbers = #tpu.dot_dimension_numbers<[1], [0], [0], [1], [0, 0, 1, 1], [], []>} : vector<32x32xf32>, vector<32x64xf32>, vector<32x64xf32> -> vector<32x64xf32>
    %c0_28 = arith.constant 0 : index
    %c0_29 = arith.constant 0 : index
    %157 = vector.load %arg5[%c0_28, %c0_29] : memref<32x1xf32, #tpu.memory_space<vmem>>, vector<32x1xf32>
    %158 = vector.broadcast %157 : vector<32x1xf32> to vector<32x64xf32>
    %159 = arith.addf %156, %158 : vector<32x64xf32>
    %cst_30 = arith.constant 0.00999999977 : f32
    %160 = vector.broadcast %cst_30 : f32 to vector<32x64xf32>
    %161 = arith.mulf %160, %159 : vector<32x64xf32>
    %162 = arith.maximumf %159, %161 : vector<32x64xf32>
    %c0_31 = arith.constant 0 : index
    %c0_32 = arith.constant 0 : index
    %163 = vector.load %arg6[%c0_31, %c0_32] : memref<1x32xf32, #tpu.memory_space<vmem>>, vector<1x32xf32>
    %cst_33 = arith.constant dense<0.000000e+00> : vector<1x64xf32>
    %164 = tpu.matmul %163, %162, %cst_33 {dimension_numbers = #tpu.dot_dimension_numbers<[1], [0], [0], [1], [0, 0, 1, 1], [], []>} : vector<1x32xf32>, vector<32x64xf32>, vector<1x64xf32> -> vector<1x64xf32>
    %c0_34 = arith.constant 0 : index
    %c0_35 = arith.constant 0 : index
    %165 = vector.load %arg7[%c0_34, %c0_35] : memref<1x1xf32, #tpu.memory_space<vmem>>, vector<1x1xf32>
    %166 = vector.broadcast %165 : vector<1x1xf32> to vector<1x64xf32>
    %167 = arith.addf %164, %166 : vector<1x64xf32>
    %c0_36 = arith.constant 0 : index
    %c0_37 = arith.constant 0 : index
    %168 = vector.load %arg8[%c0_36, %c0_37] : memref<1x64xf32, #tpu.memory_space<vmem>>, vector<1x64xf32>
    tpu.vector_store %arg8[%c0_36, %c0_37], %167 {strides = array<i32>} : memref<1x64xf32, #tpu.memory_space<vmem>>, vector<1x64xf32>,
    return
  }
}

</mosaic_0001>

<llo_original>
// kernel: lstm_model_forward.1
$region0: #{lstm_model_forward.1}
  #allocation0 [shape = 'u32[]', space=smem, size = 0x4, offset = 0x4, fixed_abs, tag = 'smem constant byte address 0x4 - core index']
  #allocation1 [shape = 'u32[144,128]{1,0:T(1,128)}', space=vmem, size = 0x12000, scoped, tag = 'internal scratch']
  #allocation2 [shape = 'f32[1,1]{1,0:T(1,128)S(1)}', space=vmem, size = 0x200, scoped, tag = 'scoped memory for lstm_model_forward.1']
  %s0 = inlined_call_operand.vmem [shape: f32[64,13], index: 0, kind: input, shape index: {}]
  %s1 = inlined_call_operand.vmem [shape: f32[13,128], index: 1, kind: input, shape index: {}]
  %s2 = inlined_call_operand.vmem [shape: f32[32,128], index: 2, kind: input, shape index: {}]
  %s3 = inlined_call_operand.vmem [shape: f32[1,128], index: 3, kind: input, shape index: {}]
  %s4 = inlined_call_operand.vmem [shape: f32[32,32], index: 4, kind: input, shape index: {}]
  %s5 = inlined_call_operand.vmem [shape: f32[32,1], index: 5, kind: input, shape index: {}]
  %s6 = inlined_call_operand.vmem [shape: f32[1,32], index: 6, kind: input, shape index: {}]
  %s7 = inlined_call_operand.<no memory space> [shape: f32[1,1], index: 7, kind: input, shape index: {}]
  %s8 = inlined_call_operand.vmem [shape: f32[1,64], index: 8, kind: output, shape index: {}]
  %s9 = sld [smem:[#allocation0]]
  $region42: #{lstm_model_forward.1} parent=0
    _
  %s11 = ssub.s32 1, %s9
  %s12 = scalar_select 0, %s11, %s9
  %v13 = vstv %s7
  %14 = vst [vmem:[#allocation2] sm:$0x1] %v13
  // Predicated region
  $region2: #{lstm_model_forward.1} parent=0 // pred_check
    _
  $region3: #{lstm_model_forward.1} parent=0 // pred_check_branch
    %16 = sbr.rel (0) target = $region5
  $region4: #{lstm_model_forward.1} parent=0 // pred_region
    _
  $region5: #{lstm_model_forward.1} parent=0 // pred_fallthru
    _
  // Predicated region
  $region6: #{lstm_model_forward.1} parent=0 // pred_check
    _
  $region7: #{lstm_model_forward.1} parent=0 // pred_check_branch
    %18 = sbr.rel (0) target = $region9
  $region8: #{lstm_model_forward.1} parent=0 // pred_region
    _
  $region9: #{lstm_model_forward.1} parent=0 // pred_fallthru
    _
  // Predicated region
  $region10: #{lstm_model_forward.1} parent=0 // pred_check
    _
  $region11: #{lstm_model_forward.1} parent=0 // pred_check_branch
    %20 = sbr.rel (0) target = $region13
  $region12: #{lstm_model_forward.1} parent=0 // pred_region
    _
  $region13: #{lstm_model_forward.1} parent=0 // pred_fallthru
    _
  // Predicated region
  $region14: #{lstm_model_forward.1} parent=0 // pred_check
    _
  $region15: #{lstm_model_forward.1} parent=0 // pred_check_branch
    %22 = sbr.rel (0) target = $region17
  $region16: #{lstm_model_forward.1} parent=0 // pred_region
    _
  $region17: #{lstm_model_forward.1} parent=0 // pred_fallthru
    _
  // Predicated region
  $region18: #{lstm_model_forward.1} parent=0 // pred_check
    _
  $region19: #{lstm_model_forward.1} parent=0 // pred_check_branch
    %24 = sbr.rel (0) target = $region21
  $region20: #{lstm_model_forward.1} parent=0 // pred_region
    _
  $region21: #{lstm_model_forward.1} parent=0 // pred_fallthru
    _
  // Predicated region
  $region22: #{lstm_model_forward.1} parent=0 // pred_check
    _
  $region23: #{lstm_model_forward.1} parent=0 // pred_check_branch
    %26 = sbr.rel (0) target = $region25
  $region24: #{lstm_model_forward.1} parent=0 // pred_region
    _
  $region25: #{lstm_model_forward.1} parent=0 // pred_fallthru
    _
  // Predicated region
  $region26: #{lstm_model_forward.1} parent=0 // pred_check
    _
  $region27: #{lstm_model_forward.1} parent=0 // pred_check_branch
    %28 = sbr.rel (0) target = $region29
  $region28: #{lstm_model_forward.1} parent=0 // pred_region
    _
  $region29: #{lstm_model_forward.1} parent=0 // pred_fallthru
    _
  // Predicated region
  $region30: #{lstm_model_forward.1} parent=0 // pred_check
    _
  $region31: #{lstm_model_forward.1} parent=0 // pred_check_branch
    %30 = sbr.rel (0) target = $region33
  $region32: #{lstm_model_forward.1} parent=0 // pred_region
    _
  $region33: #{lstm_model_forward.1} parent=0 // pred_fallthru
    _
  %v31 = vld [vmem:[%s0] sm:$0xff]
  %v32 = vld [vmem:[%s0 + $0x8] sm:$0xff]
  %v33 = vld [vmem:[%s0 + $0x10] sm:$0xff]
  %v34 = vld [vmem:[%s0 + $0x18] sm:$0xff]
  %v35 = vld [vmem:[%s0 + $0x20] sm:$0xff]
  %v36 = vld [vmem:[%s0 + $0x28] sm:$0xff]
  %v37 = vld [vmem:[%s0 + $0x30] sm:$0xff]
  %v38 = vld [vmem:[%s0 + $0x38] sm:$0xff]
  %v39 = vld [vmem:[%s1] sm:$0xff]
  %v40 = vld [vmem:[%s1 + $0x8] sm:$0x1f]
  %v41 = vld [vmem:[%s3] sm:$0x1]
  %v43 = vlaneseq
  %v44 = vshrl.u32 %v43, 7
  %v45 = vsub.s32 0, %v44
  %v46 = vrot.slane %v41, %v45
  %vm48 = vcmask 105472
  %v50 = vsel %vm48, %v31, 0
  %v53 = vsel %vm48, %v32, 0
  %v56 = vsel %vm48, %v33, 0
  %v59 = vsel %vm48, %v34, 0
  %v62 = vsel %vm48, %v35, 0
  %v65 = vsel %vm48, %v36, 0
  %v68 = vsel %vm48, %v37, 0
  %v71 = vsel %vm48, %v38, 0
  %vm73 = vcmask 1044480
  %v75 = vsel %vm73, %v40, 0
  %77 = vmatprep.subr.mxu0 0.0
  %78 = vmatpush1.msra.mxu0 0.0
  %79 = vmatprep.subr.mxu0 0.0
  %80 = vmatpush1.msra.mxu0 0.0
  %81 = vmatprep.subr.mxu0 0.0
  %82 = vmatpush1.msra.mxu0 0.0
  %83 = vmatprep.subr.mxu0 0.0
  %84 = vmatpush1.msra.mxu0 0.0
  %85 = vmatprep.subr.mxu0 0.0
  %86 = vmatpush1.msra.mxu0 0.0
  %87 = vmatprep.subr.mxu0 0.0
  %88 = vmatpush1.msra.mxu0 0.0
  %89 = vmatprep.subr.mxu0 0.0
  %90 = vmatpush1.msra.mxu0 0.0
  %91 = vmatprep.subr.mxu0 0.0
  %92 = vmatpush1.msra.mxu0 0.0
  %93 = vmatprep.subr.mxu0 0.0
  %94 = vmatpush1.msra.mxu0 0.0
  %95 = vmatprep.subr.mxu0 0.0
  %96 = vmatpush1.msra.mxu0 0.0
  %97 = vmatprep.subr.mxu0 0.0
  %98 = vmatpush1.msra.mxu0 0.0
  %99 = vmatprep.subr.mxu0 0.0
  %100 = vmatpush1.msra.mxu0 0.0
  %101 = vmatprep.subr.mxu0 0.0
  %102 = vmatpush1.msra.mxu0 0.0
  %103 = vmatprep.subr.mxu0 0.0
  %104 = vmatpush1.msra.mxu0 0.0
  %105 = vmatprep.subr.mxu0 0.0
  %106 = vmatpush1.msra.mxu0 %v75
  %107 = vmatprep.subr.mxu0 0.0
  %108 = vmatpush1.msra.mxu0 %v39
  %109 = vmatprep.subr.mxu0 0.0
  %110 = vmatpush2.msra.mxu0 0.0
  %111 = vmatprep.subr.mxu0 0.0
  %112 = vmatpush2.msra.mxu0 0.0
  %113 = vmatprep.subr.mxu0 0.0
  %114 = vmatpush2.msra.mxu0 0.0
  %115 = vmatprep.subr.mxu0 0.0
  %116 = vmatpush2.msra.mxu0 0.0
  %117 = vmatprep.subr.mxu0 0.0
  %118 = vmatpush2.msra.mxu0 0.0
  %119 = vmatprep.subr.mxu0 0.0
  %120 = vmatpush2.msra.mxu0 0.0
  %121 = vmatprep.subr.mxu0 0.0
  %122 = vmatpush2.msra.mxu0 0.0
  %123 = vmatprep.subr.mxu0 0.0
  %124 = vmatpush2.msra.mxu0 0.0
  %125 = vmatprep.subr.mxu0 0.0
  %126 = vmatpush2.msra.mxu0 0.0
  %127 = vmatprep.subr.mxu0 0.0
  %128 = vmatpush2.msra.mxu0 0.0
  %129 = vmatprep.subr.mxu0 0.0
  %130 = vmatpush2.msra.mxu0 0.0
  %131 = vmatprep.subr.mxu0 0.0
  %132 = vmatpush2.msra.mxu0 0.0
  %133 = vmatprep.subr.mxu0 0.0
  %134 = vmatpush2.msra.mxu0 0.0
  %135 = vmatprep.subr.mxu0 0.0
  %136 = vmatpush2.msra.mxu0 0.0
  %137 = vmatprep.subr.mxu0 0.0
  %138 = vmatpush2.msra.mxu0 0.0
  %139 = vmatprep.subr.mxu0 0.0
  %140 = vmatpush2.msra.mxu0 0.0
  %141 = vmatprep.mubr.f32.mxu0 0.0
  %142 = vmatmul.mubr.f32.gmra.mxu0 %v50
  %v143 = vpop.f32.mrf.mxu0
  %v144 = vadd.f32 %v46, %v143
  %v145 = vpop.f32.mrf.mxu0
  %146 = vmatprep.mubr.f32.mxu0 0.0
  %147 = vmatmul.mubr.f32.gmra.mxu0 %v53
  %v148 = vpop.f32.mrf.mxu0
  %v149 = vadd.f32 %v46, %v148
  %v150 = vpop.f32.mrf.mxu0
  %151 = vmatprep.mubr.f32.mxu0 0.0
  %152 = vmatmul.mubr.f32.gmra.mxu0 %v56
  %v153 = vpop.f32.mrf.mxu0
  %v154 = vadd.f32 %v46, %v153
  %v155 = vpop.f32.mrf.mxu0
  %156 = vmatprep.mubr.f32.mxu0 0.0
  %157 = vmatmul.mubr.f32.gmra.mxu0 %v59
  %v158 = vpop.f32.mrf.mxu0
  %v159 = vadd.f32 %v46, %v158
  %v160 = vpop.f32.mrf.mxu0
  %161 = vmatprep.mubr.f32.mxu0 0.0
  %162 = vmatmul.mubr.f32.gmra.mxu0 %v62
  %v163 = vpop.f32.mrf.mxu0
  %v164 = vadd.f32 %v46, %v163
  %v165 = vpop.f32.mrf.mxu0
  %166 = vmatprep.mubr.f32.mxu0 0.0
  %167 = vmatmul.mubr.f32.gmra.mxu0 %v65
  %v168 = vpop.f32.mrf.mxu0
  %v169 = vadd.f32 %v46, %v168
  %v170 = vpop.f32.mrf.mxu0
  %171 = vmatprep.mubr.f32.mxu0 0.0
  %172 = vmatmul.mubr.f32.gmra.mxu0 %v68
  %v173 = vpop.f32.mrf.mxu0
  %v174 = vadd.f32 %v46, %v173
  %v175 = vpop.f32.mrf.mxu0
  %176 = vmatprep.mubr.f32.mxu0 0.0
  %177 = vmatmul.mubr.f32.gmra.mxu0 %v71
  %v178 = vpop.f32.mrf.mxu0
  %v179 = vadd.f32 %v46, %v178
  %v180 = vpop.f32.mrf.mxu0
  %181 = vdwg.mxu0
  %v182 = vld [vmem:[%s2] sm:$0xff]
  %v183 = vld [vmem:[%s2 + $0x8] sm:$0xff]
  %v184 = vld [vmem:[%s2 + $0x10] sm:$0xff]
  %v185 = vld [vmem:[%s2 + $0x18] sm:$0xff]
  %vm186 = vcmask 261120
  %v188 = vsel %vm186, 0.0, 0
  %190 = vmatprep.subr.mxu0 0.0
  %191 = vmatpush1.msra.mxu0 0.0
  %192 = vmatprep.subr.mxu0 0.0
  %193 = vmatpush1.msra.mxu0 0.0
  %194 = vmatprep.subr.mxu0 0.0
  %195 = vmatpush1.msra.mxu0 0.0
  %196 = vmatprep.subr.mxu0 0.0
  %197 = vmatpush1.msra.mxu0 0.0
  %198 = vmatprep.subr.mxu0 0.0
  %199 = vmatpush1.msra.mxu0 0.0
  %200 = vmatprep.subr.mxu0 0.0
  %201 = vmatpush1.msra.mxu0 0.0
  %202 = vmatprep.subr.mxu0 0.0
  %203 = vmatpush1.msra.mxu0 0.0
  %204 = vmatprep.subr.mxu0 0.0
  %205 = vmatpush1.msra.mxu0 0.0
  %206 = vmatprep.subr.mxu0 0.0
  %207 = vmatpush1.msra.mxu0 0.0
  %208 = vmatprep.subr.mxu0 0.0
  %209 = vmatpush1.msra.mxu0 0.0
  %210 = vmatprep.subr.mxu0 0.0
  %211 = vmatpush1.msra.mxu0 0.0
  %212 = vmatprep.subr.mxu0 0.0
  %213 = vmatpush1.msra.mxu0 0.0
  %214 = vmatprep.subr.mxu0 0.0
  %215 = vmatpush1.msra.mxu0 %v185
  %216 = vmatprep.subr.mxu0 0.0
  %217 = vmatpush1.msra.mxu0 %v184
  %218 = vmatprep.subr.mxu0 0.0
  %219 = vmatpush1.msra.mxu0 %v183
  %220 = vmatprep.subr.mxu0 0.0
  %221 = vmatpush1.msra.mxu0 %v182
  %222 = vmatprep.subr.mxu0 0.0
  %223 = vmatpush2.msra.mxu0 0.0
  %224 = vmatprep.subr.mxu0 0.0
  %225 = vmatpush2.msra.mxu0 0.0
  %226 = vmatprep.subr.mxu0 0.0
  %227 = vmatpush2.msra.mxu0 0.0
  %228 = vmatprep.subr.mxu0 0.0
  %229 = vmatpush2.msra.mxu0 0.0
  %230 = vmatprep.subr.mxu0 0.0
  %231 = vmatpush2.msra.mxu0 0.0
  %232 = vmatprep.subr.mxu0 0.0
  %233 = vmatpush2.msra.mxu0 0.0
  %234 = vmatprep.subr.mxu0 0.0
  %235 = vmatpush2.msra.mxu0 0.0
  %236 = vmatprep.subr.mxu0 0.0
  %237 = vmatpush2.msra.mxu0 0.0
  %238 = vmatprep.subr.mxu0 0.0
  %239 = vmatpush2.msra.mxu0 0.0
  %240 = vmatprep.subr.mxu0 0.0
  %241 = vmatpush2.msra.mxu0 0.0
  %242 = vmatprep.subr.mxu0 0.0
  %243 = vmatpush2.msra.mxu0 0.0
  %244 = vmatprep.subr.mxu0 0.0
  %245 = vmatpush2.msra.mxu0 0.0
  %246 = vmatprep.subr.mxu0 0.0
  %247 = vmatpush2.msra.mxu0 0.0
  %248 = vmatprep.subr.mxu0 0.0
  %249 = vmatpush2.msra.mxu0 0.0
  %250 = vmatprep.subr.mxu0 0.0
  %251 = vmatpush2.msra.mxu0 0.0
  %252 = vmatprep.subr.mxu0 0.0
  %253 = vmatpush2.msra.mxu0 0.0
  %254 = vmatprep.mubr.f32.mxu0 0.0
  %255 = vmatmul.mubr.f32.gmra.mxu0 %v188
  %v256 = vpop.f32.mrf.mxu0
  %v257 = vadd.f32 0.0, %v256
  %v258 = vpop.f32.mrf.mxu0
  %259 = vdwg.mxu0
  %v260 = vadd.f32 %v144, %v257
  %v261 = vxor.u32 %v260, 2147483648
  %v262 = vmul.f32 %v261, 1.442695
  %v263 = vpow.pop %v262
  %v264 = vadd.f32 %v263, 1.0
  %v265 = vrcp.pop %v264
  %v266 = vmul.f32 1.0, %v265
  %v267 = vtanh.pop %v260
  %v268 = vmul.f32 %v266, 0.0
  %270 = vrot.lane.b32.xlu0 %v267, 64
  %v271 = vpop.permute.xlu0 %270
  %v273 = vmul.f32 %v266, %v271
  %275 = vrot.lane.b32.xlu0 %v273, 32
  %v276 = vpop.permute.xlu0 %275
  %v278 = vadd.f32 %v268, %v276
  %v279 = vtanh.pop %v278
  %281 = vrot.lane.b32.xlu0 %v279, 64
  %v282 = vpop.permute.xlu0 %281
  %v284 = vmul.f32 %v266, %v282
  %286 = vrot.lane.b32.xlu0 %v284, 32
  %v287 = vpop.permute.xlu0 %286
  %v288 = vsel %vm186, %v287, 0
  %290 = vmatprep.subr.mxu0 0.0
  %291 = vmatpush1.msra.mxu0 0.0
  %292 = vmatprep.subr.mxu0 0.0
  %293 = vmatpush1.msra.mxu0 0.0
  %294 = vmatprep.subr.mxu0 0.0
  %295 = vmatpush1.msra.mxu0 0.0
  %296 = vmatprep.subr.mxu0 0.0
  %297 = vmatpush1.msra.mxu0 0.0
  %298 = vmatprep.subr.mxu0 0.0
  %299 = vmatpush1.msra.mxu0 0.0
  %300 = vmatprep.subr.mxu0 0.0
  %301 = vmatpush1.msra.mxu0 0.0
  %302 = vmatprep.subr.mxu0 0.0
  %303 = vmatpush1.msra.mxu0 0.0
  %304 = vmatprep.subr.mxu0 0.0
  %305 = vmatpush1.msra.mxu0 0.0
  %306 = vmatprep.subr.mxu0 0.0
  %307 = vmatpush1.msra.mxu0 0.0
  %308 = vmatprep.subr.mxu0 0.0
  %309 = vmatpush1.msra.mxu0 0.0
  %310 = vmatprep.subr.mxu0 0.0
  %311 = vmatpush1.msra.mxu0 0.0
  %312 = vmatprep.subr.mxu0 0.0
  %313 = vmatpush1.msra.mxu0 0.0
  %314 = vmatprep.subr.mxu0 0.0
  %315 = vmatpush1.msra.mxu0 %v185
  %316 = vmatprep.subr.mxu0 0.0
  %317 = vmatpush1.msra.mxu0 %v184
  %318 = vmatprep.subr.mxu0 0.0
  %319 = vmatpush1.msra.mxu0 %v183
  %320 = vmatprep.subr.mxu0 0.0
  %321 = vmatpush1.msra.mxu0 %v182
  %322 = vmatprep.subr.mxu0 0.0
  %323 = vmatpush2.msra.mxu0 0.0
  %324 = vmatprep.subr.mxu0 0.0
  %325 = vmatpush2.msra.mxu0 0.0
  %326 = vmatprep.subr.mxu0 0.0
  %327 = vmatpush2.msra.mxu0 0.0
  %328 = vmatprep.subr.mxu0 0.0
  %329 = vmatpush2.msra.mxu0 0.0
  %330 = vmatprep.subr.mxu0 0.0
  %331 = vmatpush2.msra.mxu0 0.0
  %332 = vmatprep.subr.mxu0 0.0
  %333 = vmatpush2.msra.mxu0 0.0
  %334 = vmatprep.subr.mxu0 0.0
  %335 = vmatpush2.msra.mxu0 0.0
  %336 = vmatprep.subr.mxu0 0.0
  %337 = vmatpush2.msra.mxu0 0.0
  %338 = vmatprep.subr.mxu0 0.0
  %339 = vmatpush2.msra.mxu0 0.0
  %340 = vmatprep.subr.mxu0 0.0
  %341 = vmatpush2.msra.mxu0 0.0
  %342 = vmatprep.subr.mxu0 0.0
  %343 = vmatpush2.msra.mxu0 0.0
  %344 = vmatprep.subr.mxu0 0.0
  %345 = vmatpush2.msra.mxu0 0.0
  %346 = vmatprep.subr.mxu0 0.0
  %347 = vmatpush2.msra.mxu0 0.0
  %348 = vmatprep.subr.mxu0 0.0
  %349 = vmatpush2.msra.mxu0 0.0
  %350 = vmatprep.subr.mxu0 0.0
  %351 = vmatpush2.msra.mxu0 0.0
  %352 = vmatprep.subr.mxu0 0.0
  %353 = vmatpush2.msra.mxu0 0.0
  %354 = vmatprep.mubr.f32.mxu0 0.0
  %355 = vmatmul.mubr.f32.gmra.mxu0 %v288
  %v356 = vpop.f32.mrf.mxu0
  %v357 = vadd.f32 0.0, %v356
  %v358 = vpop.f32.mrf.mxu0
  %359 = vdwg.mxu0
  %v360 = vadd.f32 %v149, %v357
  %v361 = vxor.u32 %v360, 2147483648
  %v362 = vmul.f32 %v361, 1.442695
  %v363 = vpow.pop %v362
  %v364 = vadd.f32 %v363, 1.0
  %v365 = vrcp.pop %v364
  %v366 = vmul.f32 1.0, %v365
  %v367 = vtanh.pop %v360
  %v368 = vmul.f32 %v366, %v278
  %370 = vrot.lane.b32.xlu0 %v367, 64
  %v371 = vpop.permute.xlu0 %370
  %v373 = vmul.f32 %v366, %v371
  %375 = vrot.lane.b32.xlu0 %v373, 32
  %v376 = vpop.permute.xlu0 %375
  %v378 = vadd.f32 %v368, %v376
  %v379 = vtanh.pop %v378
  %381 = vrot.lane.b32.xlu0 %v379, 64
  %v382 = vpop.permute.xlu0 %381
  %v384 = vmul.f32 %v366, %v382
  %386 = vrot.lane.b32.xlu0 %v384, 32
  %v387 = vpop.permute.xlu0 %386
  %v388 = vsel %vm186, %v387, 0
  %390 = vmatprep.subr.mxu0 0.0
  %391 = vmatpush1.msra.mxu0 0.0
  %392 = vmatprep.subr.mxu0 0.0
  %393 = vmatpush1.msra.mxu0 0.0
  %394 = vmatprep.subr.mxu0 0.0
  %395 = vmatpush1.msra.mxu0 0.0
  %396 = vmatprep.subr.mxu0 0.0
  %397 = vmatpush1.msra.mxu0 0.0
  %398 = vmatprep.subr.mxu0 0.0
  %399 = vmatpush1.msra.mxu0 0.0
  %400 = vmatprep.subr.mxu0 0.0
  %401 = vmatpush1.msra.mxu0 0.0
  %402 = vmatprep.subr.mxu0 0.0
  %403 = vmatpush1.msra.mxu0 0.0
  %404 = vmatprep.subr.mxu0 0.0
  %405 = vmatpush1.msra.mxu0 0.0
  %406 = vmatprep.subr.mxu0 0.0
  %407 = vmatpush1.msra.mxu0 0.0
  %408 = vmatprep.subr.mxu0 0.0
  %409 = vmatpush1.msra.mxu0 0.0
  %410 = vmatprep.subr.mxu0 0.0
  %411 = vmatpush1.msra.mxu0 0.0
  %412 = vmatprep.subr.mxu0 0.0
  %413 = vmatpush1.msra.mxu0 0.0
  %414 = vmatprep.subr.mxu0 0.0
  %415 = vmatpush1.msra.mxu0 %v185
  %416 = vmatprep.subr.mxu0 0.0
  %417 = vmatpush1.msra.mxu0 %v184
  %418 = vmatprep.subr.mxu0 0.0
  %419 = vmatpush1.msra.mxu0 %v183
  %420 = vmatprep.subr.mxu0 0.0
  %421 = vmatpush1.msra.mxu0 %v182
  %422 = vmatprep.subr.mxu0 0.0
  %423 = vmatpush2.msra.mxu0 0.0
  %424 = vmatprep.subr.mxu0 0.0
  %425 = vmatpush2.msra.mxu0 0.0
  %426 = vmatprep.subr.mxu0 0.0
  %427 = vmatpush2.msra.mxu0 0.0
  %428 = vmatprep.subr.mxu0 0.0
  %429 = vmatpush2.msra.mxu0 0.0
  %430 = vmatprep.subr.mxu0 0.0
  %431 = vmatpush2.msra.mxu0 0.0
  %432 = vmatprep.subr.mxu0 0.0
  %433 = vmatpush2.msra.mxu0 0.0
  %434 = vmatprep.subr.mxu0 0.0
  %435 = vmatpush2.msra.mxu0 0.0
  %436 = vmatprep.subr.mxu0 0.0
  %437 = vmatpush2.msra.mxu0 0.0
  %438 = vmatprep.subr.mxu0 0.0
  %439 = vmatpush2.msra.mxu0 0.0
  %440 = vmatprep.subr.mxu0 0.0
  %441 = vmatpush2.msra.mxu0 0.0
  %442 = vmatprep.subr.mxu0 0.0
  %443 = vmatpush2.msra.mxu0 0.0
  %444 = vmatprep.subr.mxu0 0.0
  %445 = vmatpush2.msra.mxu0 0.0
  %446 = vmatprep.subr.mxu0 0.0
  %447 = vmatpush2.msra.mxu0 0.0
  %448 = vmatprep.subr.mxu0 0.0
  %449 = vmatpush2.msra.mxu0 0.0
  %450 = vmatprep.subr.mxu0 0.0
  %451 = vmatpush2.msra.mxu0 0.0
  %452 = vmatprep.subr.mxu0 0.0
  %453 = vmatpush2.msra.mxu0 0.0
  %454 = vmatprep.mubr.f32.mxu0 0.0
  %455 = vmatmul.mubr.f32.gmra.mxu0 %v388
  %v456 = vpop.f32.mrf.mxu0
  %v457 = vadd.f32 0.0, %v456
  %v458 = vpop.f32.mrf.mxu0
  %459 = vdwg.mxu0
  %v460 = vadd.f32 %v154, %v457
  %v461 = vxor.u32 %v460, 2147483648
  %v462 = vmul.f32 %v461, 1.442695
  %v463 = vpow.pop %v462
  %v464 = vadd.f32 %v463, 1.0
  %v465 = vrcp.pop %v464
  %v466 = vmul.f32 1.0, %v465
  %v467 = vtanh.pop %v460
  %v468 = vmul.f32 %v466, %v378
  %470 = vrot.lane.b32.xlu0 %v467, 64
  %v471 = vpop.permute.xlu0 %470
  %v473 = vmul.f32 %v466, %v471
  %475 = vrot.lane.b32.xlu0 %v473, 32
  %v476 = vpop.permute.xlu0 %475
  %v478 = vadd.f32 %v468, %v476
  %v479 = vtanh.pop %v478
  %481 = vrot.lane.b32.xlu0 %v479, 64
  %v482 = vpop.permute.xlu0 %481
  %v484 = vmul.f32 %v466, %v482
  %486 = vrot.lane.b32.xlu0 %v484, 32
  %v487 = vpop.permute.xlu0 %486
  %v488 = vsel %vm186, %v487, 0
  %490 = vmatprep.subr.mxu0 0.0
  %491 = vmatpush1.msra.mxu0 0.0
  %492 = vmatprep.subr.mxu0 0.0
  %493 = vmatpush1.msra.mxu0 0.0
  %494 = vmatprep.subr.mxu0 0.0
  %495 = vmatpush1.msra.mxu0 0.0
  %496 = vmatprep.subr.mxu0 0.0
  %497 = vmatpush1.msra.mxu0 0.0
  %498 = vmatprep.subr.mxu0 0.0
  %499 = vmatpush1.msra.mxu0 0.0
  %500 = vmatprep.subr.mxu0 0.0
  %501 = vmatpush1.msra.mxu0 0.0
  %502 = vmatprep.subr.mxu0 0.0
  %503 = vmatpush1.msra.mxu0 0.0
  %504 = vmatprep.subr.mxu0 0.0
  %505 = vmatpush1.msra.mxu0 0.0
  %506 = vmatprep.subr.mxu0 0.0
  %507 = vmatpush1.msra.mxu0 0.0
  %508 = vmatprep.subr.mxu0 0.0
  %509 = vmatpush1.msra.mxu0 0.0
  %510 = vmatprep.subr.mxu0 0.0
  %511 = vmatpush1.msra.mxu0 0.0
  %512 = vmatprep.subr.mxu0 0.0
  %513 = vmatpush1.msra.mxu0 0.0
  %514 = vmatprep.subr.mxu0 0.0
  %515 = vmatpush1.msra.mxu0 %v185
  %516 = vmatprep.subr.mxu0 0.0
  %517 = vmatpush1.msra.mxu0 %v184
  %518 = vmatprep.subr.mxu0 0.0
  %519 = vmatpush1.msra.mxu0 %v183
  %520 = vmatprep.subr.mxu0 0.0
  %521 = vmatpush1.msra.mxu0 %v182
  %522 = vmatprep.subr.mxu0 0.0
  %523 = vmatpush2.msra.mxu0 0.0
  %524 = vmatprep.subr.mxu0 0.0
  %525 = vmatpush2.msra.mxu0 0.0
  %526 = vmatprep.subr.mxu0 0.0
  %527 = vmatpush2.msra.mxu0 0.0
  %528 = vmatprep.subr.mxu0 0.0
  %529 = vmatpush2.msra.mxu0 0.0
  %530 = vmatprep.subr.mxu0 0.0
  %531 = vmatpush2.msra.mxu0 0.0
  %532 = vmatprep.subr.mxu0 0.0
  %533 = vmatpush2.msra.mxu0 0.0
  %534 = vmatprep.subr.mxu0 0.0
  %535 = vmatpush2.msra.mxu0 0.0
  %536 = vmatprep.subr.mxu0 0.0
  %537 = vmatpush2.msra.mxu0 0.0
  %538 = vmatprep.subr.mxu0 0.0
  %539 = vmatpush2.msra.mxu0 0.0
  %540 = vmatprep.subr.mxu0 0.0
  %541 = vmatpush2.msra.mxu0 0.0
  %542 = vmatprep.subr.mxu0 0.0
  %543 = vmatpush2.msra.mxu0 0.0
  %544 = vmatprep.subr.mxu0 0.0
  %545 = vmatpush2.msra.mxu0 0.0
  %546 = vmatprep.subr.mxu0 0.0
  %547 = vmatpush2.msra.mxu0 0.0
  %548 = vmatprep.subr.mxu0 0.0
  %549 = vmatpush2.msra.mxu0 0.0
  %550 = vmatprep.subr.mxu0 0.0
  %551 = vmatpush2.msra.mxu0 0.0
  %552 = vmatprep.subr.mxu0 0.0
  %553 = vmatpush2.msra.mxu0 0.0
  %554 = vmatprep.mubr.f32.mxu0 0.0
  %555 = vmatmul.mubr.f32.gmra.mxu0 %v488
  %v556 = vpop.f32.mrf.mxu0
  %v557 = vadd.f32 0.0, %v556
  %v558 = vpop.f32.mrf.mxu0
  %559 = vdwg.mxu0
  %v560 = vadd.f32 %v159, %v557
  %v561 = vxor.u32 %v560, 2147483648
  %v562 = vmul.f32 %v561, 1.442695
  %v563 = vpow.pop %v562
  %v564 = vadd.f32 %v563, 1.0
  %v565 = vrcp.pop %v564
  %v566 = vmul.f32 1.0, %v565
  %v567 = vtanh.pop %v560
  %v568 = vmul.f32 %v566, %v478
  %570 = vrot.lane.b32.xlu0 %v567, 64
  %v571 = vpop.permute.xlu0 %570
  %v573 = vmul.f32 %v566, %v571
  %575 = vrot.lane.b32.xlu0 %v573, 32
  %v576 = vpop.permute.xlu0 %575
  %v578 = vadd.f32 %v568, %v576
  %v579 = vtanh.pop %v578
  %581 = vrot.lane.b32.xlu0 %v579, 64
  %v582 = vpop.permute.xlu0 %581
  %v584 = vmul.f32 %v566, %v582
  %586 = vrot.lane.b32.xlu0 %v584, 32
  %v587 = vpop.permute.xlu0 %586
  %v588 = vsel %vm186, %v587, 0
  %590 = vmatprep.subr.mxu0 0.0
  %591 = vmatpush1.msra.mxu0 0.0
  %592 = vmatprep.subr.mxu0 0.0
  %593 = vmatpush1.msra.mxu0 0.0
  %594 = vmatprep.subr.mxu0 0.0
  %595 = vmatpush1.msra.mxu0 0.0
  %596 = vmatprep.subr.mxu0 0.0
  %597 = vmatpush1.msra.mxu0 0.0
  %598 = vmatprep.subr.mxu0 0.0
  %599 = vmatpush1.msra.mxu0 0.0
  %600 = vmatprep.subr.mxu0 0.0
  %601 = vmatpush1.msra.mxu0 0.0
  %602 = vmatprep.subr.mxu0 0.0
  %603 = vmatpush1.msra.mxu0 0.0
  %604 = vmatprep.subr.mxu0 0.0
  %605 = vmatpush1.msra.mxu0 0.0
  %606 = vmatprep.subr.mxu0 0.0
  %607 = vmatpush1.msra.mxu0 0.0
  %608 = vmatprep.subr.mxu0 0.0
  %609 = vmatpush1.msra.mxu0 0.0
  %610 = vmatprep.subr.mxu0 0.0
  %611 = vmatpush1.msra.mxu0 0.0
  %612 = vmatprep.subr.mxu0 0.0
  %613 = vmatpush1.msra.mxu0 0.0
  %614 = vmatprep.subr.mxu0 0.0
  %615 = vmatpush1.msra.mxu0 %v185
  %616 = vmatprep.subr.mxu0 0.0
  %617 = vmatpush1.msra.mxu0 %v184
  %618 = vmatprep.subr.mxu0 0.0
  %619 = vmatpush1.msra.mxu0 %v183
  %620 = vmatprep.subr.mxu0 0.0
  %621 = vmatpush1.msra.mxu0 %v182
  %622 = vmatprep.subr.mxu0 0.0
  %623 = vmatpush2.msra.mxu0 0.0
  %624 = vmatprep.subr.mxu0 0.0
  %625 = vmatpush2.msra.mxu0 0.0
  %626 = vmatprep.subr.mxu0 0.0
  %627 = vmatpush2.msra.mxu0 0.0
  %628 = vmatprep.subr.mxu0 0.0
  %629 = vmatpush2.msra.mxu0 0.0
  %630 = vmatprep.subr.mxu0 0.0
  %631 = vmatpush2.msra.mxu0 0.0
  %632 = vmatprep.subr.mxu0 0.0
  %633 = vmatpush2.msra.mxu0 0.0
  %634 = vmatprep.subr.mxu0 0.0
  %635 = vmatpush2.msra.mxu0 0.0
  %636 = vmatprep.subr.mxu0 0.0
  %637 = vmatpush2.msra.mxu0 0.0
  %638 = vmatprep.subr.mxu0 0.0
  %639 = vmatpush2.msra.mxu0 0.0
  %640 = vmatprep.subr.mxu0 0.0
  %641 = vmatpush2.msra.mxu0 0.0
  %642 = vmatprep.subr.mxu0 0.0
  %643 = vmatpush2.msra.mxu0 0.0
  %644 = vmatprep.subr.mxu0 0.0
  %645 = vmatpush2.msra.mxu0 0.0
  %646 = vmatprep.subr.mxu0 0.0
  %647 = vmatpush2.msra.mxu0 0.0
  %648 = vmatprep.subr.mxu0 0.0
  %649 = vmatpush2.msra.mxu0 0.0
  %650 = vmatprep.subr.mxu0 0.0
  %651 = vmatpush2.msra.mxu0 0.0
  %652 = vmatprep.subr.mxu0 0.0
  %653 = vmatpush2.msra.mxu0 0.0
  %654 = vmatprep.mubr.f32.mxu0 0.0
  %655 = vmatmul.mubr.f32.gmra.mxu0 %v588
  %v656 = vpop.f32.mrf.mxu0
  %v657 = vadd.f32 0.0, %v656
  %v658 = vpop.f32.mrf.mxu0
  %659 = vdwg.mxu0
  %v660 = vadd.f32 %v164, %v657
  %v661 = vxor.u32 %v660, 2147483648
  %v662 = vmul.f32 %v661, 1.442695
  %v663 = vpow.pop %v662
  %v664 = vadd.f32 %v663, 1.0
  %v665 = vrcp.pop %v664
  %v666 = vmul.f32 1.0, %v665
  %v667 = vtanh.pop %v660
  %v668 = vmul.f32 %v666, %v578
  %670 = vrot.lane.b32.xlu0 %v667, 64
  %v671 = vpop.permute.xlu0 %670
  %v673 = vmul.f32 %v666, %v671
  %675 = vrot.lane.b32.xlu0 %v673, 32
  %v676 = vpop.permute.xlu0 %675
  %v678 = vadd.f32 %v668, %v676
  %v679 = vtanh.pop %v678
  %681 = vrot.lane.b32.xlu0 %v679, 64
  %v682 = vpop.permute.xlu0 %681
  %v684 = vmul.f32 %v666, %v682
  %686 = vrot.lane.b32.xlu0 %v684, 32
  %v687 = vpop.permute.xlu0 %686
  %v688 = vsel %vm186, %v687, 0
  %690 = vmatprep.subr.mxu0 0.0
  %691 = vmatpush1.msra.mxu0 0.0
  %692 = vmatprep.subr.mxu0 0.0
  %693 = vmatpush1.msra.mxu0 0.0
  %694 = vmatprep.subr.mxu0 0.0
  %695 = vmatpush1.msra.mxu0 0.0
  %696 = vmatprep.subr.mxu0 0.0
  %697 = vmatpush1.msra.mxu0 0.0
  %698 = vmatprep.subr.mxu0 0.0
  %699 = vmatpush1.msra.mxu0 0.0
  %700 = vmatprep.subr.mxu0 0.0
  %701 = vmatpush1.msra.mxu0 0.0
  %702 = vmatprep.subr.mxu0 0.0
  %703 = vmatpush1.msra.mxu0 0.0
  %704 = vmatprep.subr.mxu0 0.0
  %705 = vmatpush1.msra.mxu0 0.0
  %706 = vmatprep.subr.mxu0 0.0
  %707 = vmatpush1.msra.mxu0 0.0
  %708 = vmatprep.subr.mxu0 0.0
  %709 = vmatpush1.msra.mxu0 0.0
  %710 = vmatprep.subr.mxu0 0.0
  %711 = vmatpush1.msra.mxu0 0.0
  %712 = vmatprep.subr.mxu0 0.0
  %713 = vmatpush1.msra.mxu0 0.0
  %714 = vmatprep.subr.mxu0 0.0
  %715 = vmatpush1.msra.mxu0 %v185
  %716 = vmatprep.subr.mxu0 0.0
  %717 = vmatpush1.msra.mxu0 %v184
  %718 = vmatprep.subr.mxu0 0.0
  %719 = vmatpush1.msra.mxu0 %v183
  %720 = vmatprep.subr.mxu0 0.0
  %721 = vmatpush1.msra.mxu0 %v182
  %722 = vmatprep.subr.mxu0 0.0
  %723 = vmatpush2.msra.mxu0 0.0
  %724 = vmatprep.subr.mxu0 0.0
  %725 = vmatpush2.msra.mxu0 0.0
  %726 = vmatprep.subr.mxu0 0.0
  %727 = vmatpush2.msra.mxu0 0.0
  %728 = vmatprep.subr.mxu0 0.0
  %729 = vmatpush2.msra.mxu0 0.0
  %730 = vmatprep.subr.mxu0 0.0
  %731 = vmatpush2.msra.mxu0 0.0
  %732 = vmatprep.subr.mxu0 0.0
  %733 = vmatpush2.msra.mxu0 0.0
  %734 = vmatprep.subr.mxu0 0.0
  %735 = vmatpush2.msra.mxu0 0.0
  %736 = vmatprep.subr.mxu0 0.0
  %737 = vmatpush2.msra.mxu0 0.0
  %738 = vmatprep.subr.mxu0 0.0
  %739 = vmatpush2.msra.mxu0 0.0
  %740 = vmatprep.subr.mxu0 0.0
  %741 = vmatpush2.msra.mxu0 0.0
  %742 = vmatprep.subr.mxu0 0.0
  %743 = vmatpush2.msra.mxu0 0.0
  %744 = vmatprep.subr.mxu0 0.0
  %745 = vmatpush2.msra.mxu0 0.0
  %746 = vmatprep.subr.mxu0 0.0
  %747 = vmatpush2.msra.mxu0 0.0
  %748 = vmatprep.subr.mxu0 0.0
  %749 = vmatpush2.msra.mxu0 0.0
  %750 = vmatprep.subr.mxu0 0.0
  %751 = vmatpush2.msra.mxu0 0.0
  %752 = vmatprep.subr.mxu0 0.0
  %753 = vmatpush2.msra.mxu0 0.0
  %754 = vmatprep.mubr.f32.mxu0 0.0
  %755 = vmatmul.mubr.f32.gmra.mxu0 %v688
  %v756 = vpop.f32.mrf.mxu0
  %v757 = vadd.f32 0.0, %v756
  %v758 = vpop.f32.mrf.mxu0
  %759 = vdwg.mxu0
  %v760 = vadd.f32 %v169, %v757
  %v761 = vxor.u32 %v760, 2147483648
  %v762 = vmul.f32 %v761, 1.442695
  %v763 = vpow.pop %v762
  %v764 = vadd.f32 %v763, 1.0
  %v765 = vrcp.pop %v764
  %v766 = vmul.f32 1.0, %v765
  %v767 = vtanh.pop %v760
  %v768 = vmul.f32 %v766, %v678
  %770 = vrot.lane.b32.xlu0 %v767, 64
  %v771 = vpop.permute.xlu0 %770
  %v773 = vmul.f32 %v766, %v771
  %775 = vrot.lane.b32.xlu0 %v773, 32
  %v776 = vpop.permute.xlu0 %775
  %v778 = vadd.f32 %v768, %v776
  %v779 = vtanh.pop %v778
  %781 = vrot.lane.b32.xlu0 %v779, 64
  %v782 = vpop.permute.xlu0 %781
  %v784 = vmul.f32 %v766, %v782
  %786 = vrot.lane.b32.xlu0 %v784, 32
  %v787 = vpop.permute.xlu0 %786
  %v788 = vsel %vm186, %v787, 0
  %790 = vmatprep.subr.mxu0 0.0
  %791 = vmatpush1.msra.mxu0 0.0
  %792 = vmatprep.subr.mxu0 0.0
  %793 = vmatpush1.msra.mxu0 0.0
  %794 = vmatprep.subr.mxu0 0.0
  %795 = vmatpush1.msra.mxu0 0.0
  %796 = vmatprep.subr.mxu0 0.0
  %797 = vmatpush1.msra.mxu0 0.0
  %798 = vmatprep.subr.mxu0 0.0
  %799 = vmatpush1.msra.mxu0 0.0
  %800 = vmatprep.subr.mxu0 0.0
  %801 = vmatpush1.msra.mxu0 0.0
  %802 = vmatprep.subr.mxu0 0.0
  %803 = vmatpush1.msra.mxu0 0.0
  %804 = vmatprep.subr.mxu0 0.0
  %805 = vmatpush1.msra.mxu0 0.0
  %806 = vmatprep.subr.mxu0 0.0
  %807 = vmatpush1.msra.mxu0 0.0
  %808 = vmatprep.subr.mxu0 0.0
  %809 = vmatpush1.msra.mxu0 0.0
  %810 = vmatprep.subr.mxu0 0.0
  %811 = vmatpush1.msra.mxu0 0.0
  %812 = vmatprep.subr.mxu0 0.0
  %813 = vmatpush1.msra.mxu0 0.0
  %814 = vmatprep.subr.mxu0 0.0
  %815 = vmatpush1.msra.mxu0 %v185
  %816 = vmatprep.subr.mxu0 0.0
  %817 = vmatpush1.msra.mxu0 %v184
  %818 = vmatprep.subr.mxu0 0.0
  %819 = vmatpush1.msra.mxu0 %v183
  %820 = vmatprep.subr.mxu0 0.0
  %821 = vmatpush1.msra.mxu0 %v182
  %822 = vmatprep.subr.mxu0 0.0
  %823 = vmatpush2.msra.mxu0 0.0
  %824 = vmatprep.subr.mxu0 0.0
  %825 = vmatpush2.msra.mxu0 0.0
  %826 = vmatprep.subr.mxu0 0.0
  %827 = vmatpush2.msra.mxu0 0.0
  %828 = vmatprep.subr.mxu0 0.0
  %829 = vmatpush2.msra.mxu0 0.0
  %830 = vmatprep.subr.mxu0 0.0
  %831 = vmatpush2.msra.mxu0 0.0
  %832 = vmatprep.subr.mxu0 0.0
  %833 = vmatpush2.msra.mxu0 0.0
  %834 = vmatprep.subr.mxu0 0.0
  %835 = vmatpush2.msra.mxu0 0.0
  %836 = vmatprep.subr.mxu0 0.0
  %837 = vmatpush2.msra.mxu0 0.0
  %838 = vmatprep.subr.mxu0 0.0
  %839 = vmatpush2.msra.mxu0 0.0
  %840 = vmatprep.subr.mxu0 0.0
  %841 = vmatpush2.msra.mxu0 0.0
  %842 = vmatprep.subr.mxu0 0.0
  %843 = vmatpush2.msra.mxu0 0.0
  %844 = vmatprep.subr.mxu0 0.0
  %845 = vmatpush2.msra.mxu0 0.0
  %846 = vmatprep.subr.mxu0 0.0
  %847 = vmatpush2.msra.mxu0 0.0
  %848 = vmatprep.subr.mxu0 0.0
  %849 = vmatpush2.msra.mxu0 0.0
  %850 = vmatprep.subr.mxu0 0.0
  %851 = vmatpush2.msra.mxu0 0.0
  %852 = vmatprep.subr.mxu0 0.0
  %853 = vmatpush2.msra.mxu0 0.0
  %854 = vmatprep.mubr.f32.mxu0 0.0
  %855 = vmatmul.mubr.f32.gmra.mxu0 %v788
  %v856 = vpop.f32.mrf.mxu0
  %v857 = vadd.f32 0.0, %v856
  %v858 = vpop.f32.mrf.mxu0
  %859 = vdwg.mxu0
  %v860 = vadd.f32 %v174, %v857
  %v861 = vxor.u32 %v860, 2147483648
  %v862 = vmul.f32 %v861, 1.442695
  %v863 = vpow.pop %v862
  %v864 = vadd.f32 %v863, 1.0
  %v865 = vrcp.pop %v864
  %v866 = vmul.f32 1.0, %v865
  %v867 = vtanh.pop %v860
  %v868 = vmul.f32 %v866, %v778
  %870 = vrot.lane.b32.xlu0 %v867, 64
  %v871 = vpop.permute.xlu0 %870
  %v873 = vmul.f32 %v866, %v871
  %875 = vrot.lane.b32.xlu0 %v873, 32
  %v876 = vpop.permute.xlu0 %875
  %v878 = vadd.f32 %v868, %v876
  %v879 = vtanh.pop %v878
  %881 = vrot.lane.b32.xlu0 %v879, 64
  %v882 = vpop.permute.xlu0 %881
  %v884 = vmul.f32 %v866, %v882
  %886 = vrot.lane.b32.xlu0 %v884, 32
  %v887 = vpop.permute.xlu0 %886
  %v888 = vsel %vm186, %v887, 0
  %890 = vmatprep.subr.mxu0 0.0
  %891 = vmatpush1.msra.mxu0 0.0
  %892 = vmatprep.subr.mxu0 0.0
  %893 = vmatpush1.msra.mxu0 0.0
  %894 = vmatprep.subr.mxu0 0.0
  %895 = vmatpush1.msra.mxu0 0.0
  %896 = vmatprep.subr.mxu0 0.0
  %897 = vmatpush1.msra.mxu0 0.0
  %898 = vmatprep.subr.mxu0 0.0
  %899 = vmatpush1.msra.mxu0 0.0
  %900 = vmatprep.subr.mxu0 0.0
  %901 = vmatpush1.msra.mxu0 0.0
  %902 = vmatprep.subr.mxu0 0.0
  %903 = vmatpush1.msra.mxu0 0.0
  %904 = vmatprep.subr.mxu0 0.0
  %905 = vmatpush1.msra.mxu0 0.0
  %906 = vmatprep.subr.mxu0 0.0
  %907 = vmatpush1.msra.mxu0 0.0
  %908 = vmatprep.subr.mxu0 0.0
  %909 = vmatpush1.msra.mxu0 0.0
  %910 = vmatprep.subr.mxu0 0.0
  %911 = vmatpush1.msra.mxu0 0.0
  %912 = vmatprep.subr.mxu0 0.0
  %913 = vmatpush1.msra.mxu0 0.0
  %914 = vmatprep.subr.mxu0 0.0
  %915 = vmatpush1.msra.mxu0 %v185
  %916 = vmatprep.subr.mxu0 0.0
  %917 = vmatpush1.msra.mxu0 %v184
  %918 = vmatprep.subr.mxu0 0.0
  %919 = vmatpush1.msra.mxu0 %v183
  %920 = vmatprep.subr.mxu0 0.0
  %921 = vmatpush1.msra.mxu0 %v182
  %922 = vmatprep.subr.mxu0 0.0
  %923 = vmatpush2.msra.mxu0 0.0
  %924 = vmatprep.subr.mxu0 0.0
  %925 = vmatpush2.msra.mxu0 0.0
  %926 = vmatprep.subr.mxu0 0.0
  %927 = vmatpush2.msra.mxu0 0.0
  %928 = vmatprep.subr.mxu0 0.0
  %929 = vmatpush2.msra.mxu0 0.0
  %930 = vmatprep.subr.mxu0 0.0
  %931 = vmatpush2.msra.mxu0 0.0
  %932 = vmatprep.subr.mxu0 0.0
  %933 = vmatpush2.msra.mxu0 0.0
  %934 = vmatprep.subr.mxu0 0.0
  %935 = vmatpush2.msra.mxu0 0.0
  %936 = vmatprep.subr.mxu0 0.0
  %937 = vmatpush2.msra.mxu0 0.0
  %938 = vmatprep.subr.mxu0 0.0
  %939 = vmatpush2.msra.mxu0 0.0
  %940 = vmatprep.subr.mxu0 0.0
  %941 = vmatpush2.msra.mxu0 0.0
  %942 = vmatprep.subr.mxu0 0.0
  %943 = vmatpush2.msra.mxu0 0.0
  %944 = vmatprep.subr.mxu0 0.0
  %945 = vmatpush2.msra.mxu0 0.0
  %946 = vmatprep.subr.mxu0 0.0
  %947 = vmatpush2.msra.mxu0 0.0
  %948 = vmatprep.subr.mxu0 0.0
  %949 = vmatpush2.msra.mxu0 0.0
  %950 = vmatprep.subr.mxu0 0.0
  %951 = vmatpush2.msra.mxu0 0.0
  %952 = vmatprep.subr.mxu0 0.0
  %953 = vmatpush2.msra.mxu0 0.0
  %954 = vmatprep.mubr.f32.mxu0 0.0
  %955 = vmatmul.mubr.f32.gmra.mxu0 %v888
  %v956 = vpop.f32.mrf.mxu0
  %v957 = vadd.f32 0.0, %v956
  %v958 = vpop.f32.mrf.mxu0
  %959 = vdwg.mxu0
  %v960 = vadd.f32 %v179, %v957
  %v961 = vxor.u32 %v960, 2147483648
  %v962 = vmul.f32 %v961, 1.442695
  %v963 = vpow.pop %v962
  %v964 = vadd.f32 %v963, 1.0
  %v965 = vrcp.pop %v964
  %v966 = vmul.f32 1.0, %v965
  %v967 = vtanh.pop %v960
  %v968 = vmul.f32 %v966, %v878
  %970 = vrot.lane.b32.xlu0 %v967, 64
  %v971 = vpop.permute.xlu0 %970
  %v973 = vmul.f32 %v966, %v971
  %975 = vrot.lane.b32.xlu0 %v973, 32
  %v976 = vpop.permute.xlu0 %975
  %v978 = vadd.f32 %v968, %v976
  %v979 = vtanh.pop %v978
  %981 = vrot.lane.b32.xlu0 %v979, 64
  %v982 = vpop.permute.xlu0 %981
  %v984 = vmul.f32 %v966, %v982
  %v985 = vld [vmem:[%s4] sm:$0xff]
  %v986 = vld [vmem:[%s4 + $0x8] sm:$0xff]
  %v987 = vld [vmem:[%s4 + $0x10] sm:$0xff]
  %v988 = vld [vmem:[%s4 + $0x18] sm:$0xff]
  %v989 = vld [vmem:[%s5] sm:$0xff]
  %v990 = vld [vmem:[%s5 + $0x8] sm:$0xff]
  %v991 = vld [vmem:[%s5 + $0x10] sm:$0xff]
  %v992 = vld [vmem:[%s5 + $0x18] sm:$0xff]
  %994 = vset.pattern.permute.xlu0 0
  %995 = vperm.xlu0 %994, %v989
  %v996 = vpop.permute.xlu0 %995
  %999 = vset.pattern.permute.xlu0 0
  %1000 = vperm.xlu0 %999, %v990
  %v1001 = vpop.permute.xlu0 %1000
  %1004 = vset.pattern.permute.xlu0 0
  %1005 = vperm.xlu0 %1004, %v991
  %v1006 = vpop.permute.xlu0 %1005
  %1009 = vset.pattern.permute.xlu0 0
  %1010 = vperm.xlu0 %1009, %v992
  %v1011 = vpop.permute.xlu0 %1010
  %1014 = vrot.lane.b32.xlu0 %v984, 32
  %v1015 = vpop.permute.xlu0 %1014
  %v1017 = vsel %vm186, %v985, 0
  %v1020 = vsel %vm186, %v986, 0
  %v1023 = vsel %vm186, %v987, 0
  %v1026 = vsel %vm186, %v988, 0
  %v1028 = vsel %vm186, %v1015, 0
  %1030 = vmatprep.subr.mxu0 0.0
  %1031 = vmatpush1.xpose.msra.mxu0 0.0
  %1032 = vmatprep.subr.mxu0 0.0
  %1033 = vmatpush1.xpose.msra.mxu0 0.0
  %1034 = vmatprep.subr.mxu0 0.0
  %1035 = vmatpush1.xpose.msra.mxu0 0.0
  %1036 = vmatprep.subr.mxu0 0.0
  %1037 = vmatpush1.xpose.msra.mxu0 0.0
  %1038 = vmatprep.subr.mxu0 0.0
  %1039 = vmatpush1.xpose.msra.mxu0 0.0
  %1040 = vmatprep.subr.mxu0 0.0
  %1041 = vmatpush1.xpose.msra.mxu0 0.0
  %1042 = vmatprep.subr.mxu0 0.0
  %1043 = vmatpush1.xpose.msra.mxu0 0.0
  %1044 = vmatprep.subr.mxu0 0.0
  %1045 = vmatpush1.xpose.msra.mxu0 0.0
  %1046 = vmatprep.subr.mxu0 0.0
  %1047 = vmatpush1.xpose.msra.mxu0 %v1028
  %1048 = vmatprep.subr.mxu0 0.0
  %1049 = vmatpush1.xpose.msra.mxu0 %v888
  %1050 = vmatprep.subr.mxu0 0.0
  %1051 = vmatpush1.xpose.msra.mxu0 %v788
  %1052 = vmatprep.subr.mxu0 0.0
  %1053 = vmatpush1.xpose.msra.mxu0 %v688
  %1054 = vmatprep.subr.mxu0 0.0
  %1055 = vmatpush1.xpose.msra.mxu0 %v588
  %1056 = vmatprep.subr.mxu0 0.0
  %1057 = vmatpush1.xpose.msra.mxu0 %v488
  %1058 = vmatprep.subr.mxu0 0.0
  %1059 = vmatpush1.xpose.msra.mxu0 %v388
  %1060 = vmatprep.subr.mxu0 0.0
  %1061 = vmatpush1.xpose.msra.mxu0 %v288
  %1062 = vmatprep.subr.mxu0 0.0
  %1063 = vmatpush2.xpose.msra.mxu0 0.0
  %1064 = vmatprep.subr.mxu0 0.0
  %1065 = vmatpush2.xpose.msra.mxu0 0.0
  %1066 = vmatprep.subr.mxu0 0.0
  %1067 = vmatpush2.xpose.msra.mxu0 0.0
  %1068 = vmatprep.subr.mxu0 0.0
  %1069 = vmatpush2.xpose.msra.mxu0 0.0
  %1070 = vmatprep.subr.mxu0 0.0
  %1071 = vmatpush2.xpose.msra.mxu0 0.0
  %1072 = vmatprep.subr.mxu0 0.0
  %1073 = vmatpush2.xpose.msra.mxu0 0.0
  %1074 = vmatprep.subr.mxu0 0.0
  %1075 = vmatpush2.xpose.msra.mxu0 0.0
  %1076 = vmatprep.subr.mxu0 0.0
  %1077 = vmatpush2.xpose.msra.mxu0 0.0
  %1078 = vmatprep.subr.mxu0 0.0
  %1079 = vmatpush2.xpose.msra.mxu0 0.0
  %1080 = vmatprep.subr.mxu0 0.0
  %1081 = vmatpush2.xpose.msra.mxu0 0.0
  %1082 = vmatprep.subr.mxu0 0.0
  %1083 = vmatpush2.xpose.msra.mxu0 0.0
  %1084 = vmatprep.subr.mxu0 0.0
  %1085 = vmatpush2.xpose.msra.mxu0 0.0
  %1086 = vmatprep.subr.mxu0 0.0
  %1087 = vmatpush2.xpose.msra.mxu0 0.0
  %1088 = vmatprep.subr.mxu0 0.0
  %1089 = vmatpush2.xpose.msra.mxu0 0.0
  %1090 = vmatprep.subr.mxu0 0.0
  %1091 = vmatpush2.xpose.msra.mxu0 0.0
  %1092 = vmatprep.subr.mxu0 0.0
  %1093 = vmatpush2.xpose.msra.mxu0 0.0
  %1094 = vmatprep.mubr.f32.mxu0 0.0
  %1095 = vmatmul.mubr.f32.gmra.mxu0 %v1017
  %v1096 = vpop.f32.mrf.mxu0
  %v1097 = vadd.f32 %v996, %v1096
  %v1098 = vpop.f32.mrf.mxu0
  %1099 = vmatprep.mubr.f32.mxu0 0.0
  %1100 = vmatmul.mubr.f32.gmra.mxu0 %v1020
  %v1101 = vpop.f32.mrf.mxu0
  %v1102 = vadd.f32 %v1001, %v1101
  %v1103 = vpop.f32.mrf.mxu0
  %1104 = vmatprep.mubr.f32.mxu0 0.0
  %1105 = vmatmul.mubr.f32.gmra.mxu0 %v1023
  %v1106 = vpop.f32.mrf.mxu0
  %v1107 = vadd.f32 %v1006, %v1106
  %v1108 = vpop.f32.mrf.mxu0
  %1109 = vmatprep.mubr.f32.mxu0 0.0
  %1110 = vmatmul.mubr.f32.gmra.mxu0 %v1026
  %v1111 = vpop.f32.mrf.mxu0
  %v1112 = vadd.f32 %v1011, %v1111
  %v1113 = vpop.f32.mrf.mxu0
  %1114 = vdwg.mxu0
  %v1115 = vmul.f32 %v1097, 0.01
  %v1116 = vmul.f32 %v1102, 0.01
  %v1117 = vmul.f32 %v1107, 0.01
  %v1118 = vmul.f32 %v1112, 0.01
  %v1119 = vmax.f32 %v1097, %v1115
  %v1120 = vmax.f32 %v1102, %v1116
  %v1121 = vmax.f32 %v1107, %v1117
  %v1122 = vmax.f32 %v1112, %v1118
  %v1123 = vld [vmem:[%s6] sm:$0x1]
  %v1124 = vld [vmem:[#allocation2] sm:$0x1]
  %1126 = vset.pattern.permute.xlu0 0
  %1127 = vperm.xlu0 %1126, %v1124
  %v1128 = vpop.permute.xlu0 %1127
  %v1130 = vlaneseq
  %v1131 = vshrl.u32 %v1130, 7
  %v1132 = vsub.s32 0, %v1131
  %v1133 = vrot.slane %v1128, %v1132
  %v1135 = vsel %vm186, %v1123, 0
  %1137 = vmatprep.subr.mxu0 0.0
  %1138 = vmatpush1.msra.mxu0 0.0
  %1139 = vmatprep.subr.mxu0 0.0
  %1140 = vmatpush1.msra.mxu0 0.0
  %1141 = vmatprep.subr.mxu0 0.0
  %1142 = vmatpush1.msra.mxu0 0.0
  %1143 = vmatprep.subr.mxu0 0.0
  %1144 = vmatpush1.msra.mxu0 0.0
  %1145 = vmatprep.subr.mxu0 0.0
  %1146 = vmatpush1.msra.mxu0 0.0
  %1147 = vmatprep.subr.mxu0 0.0
  %1148 = vmatpush1.msra.mxu0 0.0
  %1149 = vmatprep.subr.mxu0 0.0
  %1150 = vmatpush1.msra.mxu0 0.0
  %1151 = vmatprep.subr.mxu0 0.0
  %1152 = vmatpush1.msra.mxu0 0.0
  %1153 = vmatprep.subr.mxu0 0.0
  %1154 = vmatpush1.msra.mxu0 0.0
  %1155 = vmatprep.subr.mxu0 0.0
  %1156 = vmatpush1.msra.mxu0 0.0
  %1157 = vmatprep.subr.mxu0 0.0
  %1158 = vmatpush1.msra.mxu0 0.0
  %1159 = vmatprep.subr.mxu0 0.0
  %1160 = vmatpush1.msra.mxu0 0.0
  %1161 = vmatprep.subr.mxu0 0.0
  %1162 = vmatpush1.msra.mxu0 %v1122
  %1163 = vmatprep.subr.mxu0 0.0
  %1164 = vmatpush1.msra.mxu0 %v1121
  %1165 = vmatprep.subr.mxu0 0.0
  %1166 = vmatpush1.msra.mxu0 %v1120
  %1167 = vmatprep.subr.mxu0 0.0
  %1168 = vmatpush1.msra.mxu0 %v1119
  %1169 = vmatprep.subr.mxu0 0.0
  %1170 = vmatpush2.msra.mxu0 0.0
  %1171 = vmatprep.subr.mxu0 0.0
  %1172 = vmatpush2.msra.mxu0 0.0
  %1173 = vmatprep.subr.mxu0 0.0
  %1174 = vmatpush2.msra.mxu0 0.0
  %1175 = vmatprep.subr.mxu0 0.0
  %1176 = vmatpush2.msra.mxu0 0.0
  %1177 = vmatprep.subr.mxu0 0.0
  %1178 = vmatpush2.msra.mxu0 0.0
  %1179 = vmatprep.subr.mxu0 0.0
  %1180 = vmatpush2.msra.mxu0 0.0
  %1181 = vmatprep.subr.mxu0 0.0
  %1182 = vmatpush2.msra.mxu0 0.0
  %1183 = vmatprep.subr.mxu0 0.0
  %1184 = vmatpush2.msra.mxu0 0.0
  %1185 = vmatprep.subr.mxu0 0.0
  %1186 = vmatpush2.msra.mxu0 0.0
  %1187 = vmatprep.subr.mxu0 0.0
  %1188 = vmatpush2.msra.mxu0 0.0
  %1189 = vmatprep.subr.mxu0 0.0
  %1190 = vmatpush2.msra.mxu0 0.0
  %1191 = vmatprep.subr.mxu0 0.0
  %1192 = vmatpush2.msra.mxu0 0.0
  %1193 = vmatprep.subr.mxu0 0.0
  %1194 = vmatpush2.msra.mxu0 0.0
  %1195 = vmatprep.subr.mxu0 0.0
  %1196 = vmatpush2.msra.mxu0 0.0
  %1197 = vmatprep.subr.mxu0 0.0
  %1198 = vmatpush2.msra.mxu0 0.0
  %1199 = vmatprep.subr.mxu0 0.0
  %1200 = vmatpush2.msra.mxu0 0.0
  %1201 = vmatprep.mubr.f32.mxu0 0.0
  %1202 = vmatmul.mubr.f32.gmra.mxu0 %v1135
  %v1203 = vpop.f32.mrf.mxu0
  %v1204 = vadd.f32 %v1133, %v1203
  %v1205 = vpop.f32.mrf.mxu0
  %1206 = vdwg.mxu0
  %vm1207 = vcmask 516096
  %1208 = vst.msk [vmem:[%s8] sm:$0x1] %vm1207, %v1204
  // Predicated region
  $region34: #{lstm_model_forward.1} parent=0 // pred_check
    _
  $region35: #{lstm_model_forward.1} parent=0 // pred_check_branch
    %1210 = sbr.rel (0) target = $region37
  $region36: #{lstm_model_forward.1} parent=0 // pred_region
    _
  $region37: #{lstm_model_forward.1} parent=0 // pred_fallthru
    _
  // Predicated region
  $region38: #{lstm_model_forward.1} parent=0 // pred_check
    _
  $region39: #{lstm_model_forward.1} parent=0 // pred_check_branch
    %1212 = sbr.rel (0) target = $region41
  $region40: #{lstm_model_forward.1} parent=0 // pred_region
    _
  $region41: #{lstm_model_forward.1} parent=0 // pred_fallthru
    _

</llo_original>
